<compile_context>
chip_gen: v7x
topology: tpu7x:2x2x1
jax: 0.10.0
libtpu: 0.0.40
codegen_flags: <defaults>
</compile_context>

<pallas_src>
import jax
import jax.numpy as jnp
from jax import lax
from jax.experimental import pallas as pl
from jax.experimental.pallas import tpu as pltpu

_LANE = 128


def _round_up(x, m):
    return ((x + m - 1) // m) * m


def _make_kernel(*, tk, d, compute_dtype, w_resident, mask_tail):
    """Build the (row-tile, K-tile) kernel.

    x_ref: (TM, TK)               activation tile (native dtype, unpadded array)
    w_ref: (D_pad, O_pad) if resident, else (TK, O_pad)   pre-transposed weight
    b_ref: (1, O_pad)             bias, zero-padded to 128 lanes, f32
    o_ref: (TM, O_pad) f32        output block, resident in VMEM across K
    """

    def kernel(x_ref, w_ref, b_ref, o_ref):
        k = pl.program_id(1)

        @pl.when(k == 0)
        def _init():
            # Fold the bias add into the accumulator init (no extra VPU pass).
            o_ref[...] = jnp.broadcast_to(
                b_ref[...].astype(jnp.float32), o_ref.shape)

        x = x_ref[...]
        if mask_tail:
            # D is not a multiple of TK: the last K tile reads past the end of
            # x in HBM (undefined values). Zero those columns so the reduction
            # stays correct. All-true for non-final tiles, so safe to apply
            # unconditionally; cheap VPU compare+select vs. the MXU work.
            col = k * tk + lax.broadcasted_iota(jnp.int32, x.shape, 1)
            x = jnp.where(col < d, x, jnp.zeros_like(x))
        x = x.astype(compute_dtype)  # no-op for f32 inputs; bf16 feed on v7x

        if w_resident:
            # W lives fully in VMEM; grab this K slab (start is TK-aligned).
            w = w_ref[pl.ds(pl.multiple_of(k * tk, tk), tk), :]
        else:
            w = w_ref[...]

        # x (TM, TK) @ w (TK, O_pad): contraction on K, RHS lane dim = classes.
        o_ref[...] += lax.dot_general(
            x, w,
            dimension_numbers=(((1,), (0,)), ((), ())),
            preferred_element_type=jnp.float32,
        )

    return kernel


def softmax_classifier_forward(x_nchw, weight_oi, bias_o, *,
                               tm=512, tk=2048,
                               compute_dtype=jnp.float32):
    """logits = x.view(N, -1) @ W.T + b  (PyTorch nn.Linear semantics).

    x_nchw:    [N, ...]  (flattened to [N, D]; never padded or cast in HBM)
    weight_oi: [O, D]    (nn.Linear layout)
    bias_o:    [O]
    returns:   [N, O] float32 logits
    """
    n = x_nchw.shape[0]
    x2d = x_nchw.reshape(n, -1)                 # x.view(N, -1); no extra HBM pass
    N, D = x2d.shape
    O = weight_oi.shape[0]

    itemsize_c = jnp.dtype(compute_dtype).itemsize
    sub = {4: 8, 2: 16, 1: 32}.get(itemsize_c, 8)   # sublane grain per packing
    TM = min(_round_up(int(tm), sub), _round_up(N, sub))
    TK = min(_round_up(int(tk), _LANE), _round_up(D, _LANE))
    O_pad = _round_up(O, _LANE)                 # lane-dense output (unmasked vst)
    D_pad_w = _round_up(D, TK)                  # only W (tiny) gets padded

    # Weight packed once as [D_pad, O_pad]: one-time O x D transpose+pad is
    # negligible; zero rows beyond D contribute nothing.
    w_p = jnp.pad(weight_oi.T, ((0, D_pad_w - D), (0, O_pad - O))).astype(compute_dtype)
    b_p = jnp.pad(bias_o, (0, O_pad - O)).astype(jnp.float32).reshape(1, O_pad)

    grid = (pl.cdiv(N, TM), pl.cdiv(D, TK))     # reduction (K) axis last

    # Generation-aware VMEM limit (128 MiB on v5e/v6e, 64 MiB on v7x).
    try:
        vmem_cap = int(pltpu.get_tpu_info().vmem_capacity_bytes)
    except Exception:
        vmem_cap = 64 * 1024 * 1024             # conservative (v7x) fallback
    vmem_limit = max(32 * 1024 * 1024,
                     min(vmem_cap - 16 * 1024 * 1024, 100 * 1024 * 1024))

    # Decide whether W can be fully resident in VMEM (no per-row-tile re-stream).
    x_blk_bytes = 2 * TM * TK * x2d.dtype.itemsize          # double-buffered
    o_blk_bytes = 2 * TM * O_pad * 4
    w_full_bytes = 2 * D_pad_w * O_pad * itemsize_c          # conservative 2x
    w_resident = (x_blk_bytes + o_blk_bytes + w_full_bytes + (1 << 20)) <= vmem_limit

    if w_resident:
        w_spec = pl.BlockSpec((D_pad_w, O_pad), lambda i, k: (0, 0))
    else:
        w_spec = pl.BlockSpec((TK, O_pad), lambda i, k: (k, 0))

    kernel = _make_kernel(tk=TK, d=D, compute_dtype=compute_dtype,
                          w_resident=w_resident, mask_tail=(D % TK != 0))

    out = pl.pallas_call(
        kernel,
        out_shape=jax.ShapeDtypeStruct((N, O_pad), jnp.float32),
        grid_spec=pltpu.PrefetchScalarGridSpec(
            num_scalar_prefetch=0,
            grid=grid,
            in_specs=[
                pl.BlockSpec((TM, TK), lambda i, k: (i, k)),   # x tile (streamed)
                w_spec,                                        # W (resident or tiled)
                pl.BlockSpec((1, O_pad), lambda i, k: (0, 0)),  # bias
            ],
            out_specs=pl.BlockSpec((TM, O_pad), lambda i, k: (i, 0)),
        ),
        compiler_params=pltpu.CompilerParams(
            # Row tiles are independent -> "parallel"; K is a reduction.
            # On v7x, pltpu.CORE_PARALLEL on axis 0 would force 2-TC sharding.
            dimension_semantics=("parallel", "arbitrary"),
            vmem_limit_bytes=vmem_limit,
        ),
    )(x2d, w_p, b_p)

    return out[:, :O]


if __name__ == "__main__":
    key = jax.random.PRNGKey(0)
    k_x, k_w, k_b, k_x2, k_w2, k_b2 = jax.random.split(key, 6)

    # --- Test 1: clean shapes (D multiple of TK, N multiple of 8) ---
    N, C, H, W = 8, 4, 16, 16
    input_dim = C * H * W            # 1024
    output_dim = 10

    x = jax.random.normal(k_x, (N, C, H, W), dtype=jnp.float32)
    bound = 1.0 / (input_dim ** 0.5)
    weight = jax.random.uniform(k_w, (output_dim, input_dim),
                                minval=-bound, maxval=bound, dtype=jnp.float32)
    bias = jax.random.uniform(k_b, (output_dim,),
                              minval=-bound, maxval=bound, dtype=jnp.float32)

    # tk=256 so the K-reduction grid (init/accumulate across 4 steps) is exercised.
    logits = jax.block_until_ready(
        softmax_classifier_forward(x, weight, bias, tk=256))
    ref = x.reshape(N, -1) @ weight.T + bias
    assert logits.shape == (N, output_dim)
    assert jnp.allclose(logits, ref, atol=1e-4, rtol=1e-4), "mismatch vs reference (test 1)"

    # --- Test 2: ragged shapes (N not multiple of 8, D not multiple of 128) ---
    # Exercises partial row blocks and in-kernel tail-column masking.
    N2, C2, H2, W2 = 5, 3, 7, 9      # D = 189
    D2 = C2 * H2 * W2
    O2 = 10
    x2 = jax.random.normal(k_x2, (N2, C2, H2, W2), dtype=jnp.float32)
    w2 = jax.random.uniform(k_w2, (O2, D2), minval=-0.1, maxval=0.1, dtype=jnp.float32)
    b2 = jax.random.uniform(k_b2, (O2,), minval=-0.1, maxval=0.1, dtype=jnp.float32)

    logits2 = jax.block_until_ready(
        softmax_classifier_forward(x2, w2, b2, tk=128))
    ref2 = x2.reshape(N2, -1) @ w2.T + b2
    assert logits2.shape == (N2, O2)
    assert jnp.allclose(logits2, ref2, atol=1e-4, rtol=1e-4), "mismatch vs reference (test 2)"

    print("KERNEL_OK")
</pallas_src>

<mosaic_0001>
module attributes {stable_mosaic.version = 11 : i64} {
  func.func @kernel(%arg0: i32, %arg1: i32, %arg2: memref<8x256xf32, #tpu.memory_space<vmem>>, %arg3: memref<1024x128xf32, #tpu.memory_space<vmem>>, %arg4: memref<1x128xf32, #tpu.memory_space<vmem>>, %arg5: memref<8x128xf32, #tpu.memory_space<vmem>>) attributes {dimension_semantics = [#tpu.dimension_semantics<parallel>, #tpu.dimension_semantics<arbitrary>], iteration_bounds = array<i64: 1, 4>, scalar_prefetch = 0 : i64, scratch_operands = 0 : i64, tpu.core_type = #tpu.core_type<tc>, window_params = [{transform_indices = @transform_0, window_bounds = array<i64: 8, 256>}, {pipeline_mode = #tpu.pipeline_mode<synchronous>, transform_indices = @transform_1, window_bounds = array<i64: 1024, 128>}, {pipeline_mode = #tpu.pipeline_mode<synchronous>, transform_indices = @transform_2, window_bounds = array<i64: 1, 128>}, {transform_indices = @transform_3, window_bounds = array<i64: 8, 128>}]} {
    %c0_i32 = arith.constant 0 : i32
    %0 = arith.cmpi eq, %arg1, %c0_i32 : i32
    %1 = arith.extui %0 : i1 to i32
    %c0_i32_0 = arith.constant 0 : i32
    %2 = arith.cmpi ne, %1, %c0_i32_0 : i32
    scf.if %2 {
      %c0_7 = arith.constant 0 : index
      %c0_8 = arith.constant 0 : index
      %12 = vector.load %arg4[%c0_7, %c0_8] : memref<1x128xf32, #tpu.memory_space<vmem>>, vector<1x128xf32>
      %13 = vector.shape_cast %12 : vector<1x128xf32> to vector<1x128xf32>
      %14 = vector.broadcast %13 : vector<1x128xf32> to vector<8x128xf32>
      %c0_9 = arith.constant 0 : index
      %c0_10 = arith.constant 0 : index
      %15 = vector.load %arg5[%c0_9, %c0_10] : memref<8x128xf32, #tpu.memory_space<vmem>>, vector<8x128xf32>
      tpu.vector_store %arg5[%c0_9, %c0_10], %14 {strides = array<i32>} : memref<8x128xf32, #tpu.memory_space<vmem>>, vector<8x128xf32>,
    } else {
    }
    %c0 = arith.constant 0 : index
    %c0_1 = arith.constant 0 : index
    %3 = vector.load %arg2[%c0, %c0_1] : memref<8x256xf32, #tpu.memory_space<vmem>>, vector<8x256xf32>
    %c256_i32 = arith.constant 256 : i32
    %4 = arith.muli %arg1, %c256_i32 : i32
    %5 = tpu.assume_multiple %4, 256 : i32
    %6 = arith.index_cast %5 : i32 to index
    %c0_2 = arith.constant 0 : index
    %7 = vector.load %arg3[%6, %c0_2] : memref<1024x128xf32, #tpu.memory_space<vmem>>, vector<256x128xf32>
    %c0_3 = arith.constant 0 : index
    %c0_4 = arith.constant 0 : index
    %8 = vector.load %arg5[%c0_3, %c0_4] : memref<8x128xf32, #tpu.memory_space<vmem>>, vector<8x128xf32>
    %cst = arith.constant dense<0.000000e+00> : vector<8x128xf32>
    %9 = tpu.matmul %3, %7, %cst {dimension_numbers = #tpu.dot_dimension_numbers<[1], [0], [0], [1], [0, 0, 1, 1], [], []>} : vector<8x256xf32>, vector<256x128xf32>, vector<8x128xf32> -> vector<8x128xf32>
    %10 = arith.addf %8, %9 : vector<8x128xf32>
    %c0_5 = arith.constant 0 : index
    %c0_6 = arith.constant 0 : index
    %11 = vector.load %arg5[%c0_5, %c0_6] : memref<8x128xf32, #tpu.memory_space<vmem>>, vector<8x128xf32>
    tpu.vector_store %arg5[%c0_5, %c0_6], %10 {strides = array<i32>} : memref<8x128xf32, #tpu.memory_space<vmem>>, vector<8x128xf32>,
    return
  }
  func.func @transform_0(%arg0: i32, %arg1: i32) -> (i32, i32) {
    %c0_i32 = arith.constant 0 : i32
    return %arg0, %arg1 : i32, i32
  }
  func.func @transform_1(%arg0: i32, %arg1: i32) -> (i32, i32) {
    %c0_i32 = arith.constant 0 : i32
    %c0_i32_0 = arith.constant 0 : i32
    %c0_i32_1 = arith.constant 0 : i32
    return %c0_i32, %c0_i32_0 : i32, i32
  }
  func.func @transform_2(%arg0: i32, %arg1: i32) -> (i32, i32) {
    %c0_i32 = arith.constant 0 : i32
    %c0_i32_0 = arith.constant 0 : i32
    %c0_i32_1 = arith.constant 0 : i32
    return %c0_i32, %c0_i32_0 : i32, i32
  }
  func.func @transform_3(%arg0: i32, %arg1: i32) -> (i32, i32) {
    %c0_i32 = arith.constant 0 : i32
    %c0_i32_0 = arith.constant 0 : i32
    return %arg0, %c0_i32 : i32, i32
  }
}

</mosaic_0001>

<llo_original>
// kernel: tpu_custom_call.1
$region0: #{tpu_custom_call.1}
  #allocation0 [shape = 'u32[]', space=smem, size = 0x4, offset = 0x4, fixed_abs, tag = 'smem constant byte address 0x4 - core index']
  #allocation1 [shape = 'u32[144,128]{1,0:T(1,128)}', space=vmem, size = 0x12000, scoped, tag = 'internal scratch']
  %s0 = inlined_call_operand.hbm [shape: f32[8,1024], index: 0, kind: input, shape index: {}]
  %s1 = inlined_call_operand.hbm [shape: f32[1024,128], index: 1, kind: input, shape index: {}]
  %s2 = inlined_call_operand.vmem [shape: f32[1,128], index: 2, kind: input, shape index: {}]
  %s3 = inlined_call_operand.hbm [shape: f32[8,128], index: 3, kind: output, shape index: {}]
  %s4 = sld [smem:[#allocation0]]
  $region57: #{tpu_custom_call.1} parent=0
    _
  %s6 = ssub.s32 1, %s4
  %s7 = scalar_select 0, %s6, %s4
  $region1: #{tpu_custom_call.1} parent=0
    #allocation2 [shape = 'u8[16384]{0}', space=vmem, size = 0x4000, scoped, tag = 'input window, operand 0']
    #allocation3 [shape = 's32[2]{0}', space=sflag, size = 0x8, scoped, tag = 'scoped memory for tpu_custom_call.1']
    #allocation4 [shape = 's32[2]{0}', space=sflag, size = 0x8, scoped, tag = 'scoped memory for tpu_custom_call.1']
    #allocation5 [shape = 'u8[524288]{0}', space=vmem, size = 0x80000, scoped, tag = 'input window, operand 1, single buffered']
    #allocation6 [shape = 's32[1]{0}', space=sflag, size = 0x4, scoped, tag = 'scoped memory for tpu_custom_call.1']
    #allocation7 [shape = 'u8[4096]{0}', space=vmem, size = 0x1000, scoped, tag = 'output window, operand 0, single buffered']
    %8 = vsyncpa [#allocation3], 0
    %s9 = scalar_lea.sflag [#allocation3], 1
    %10 = vsyncpa %s9, 0
    %11 = vsyncpa [#allocation6], 0
    %12 = vsyncpa [#allocation4], 0
    loop: start=0, step=1, limit=6
    $region2: #{tpu_custom_call.1} parent=1 // loop_pre_header
      _
    $region3: #{tpu_custom_call.1} parent=1 // loop_header
      %s14 = sphi 0, %s18
      %p15 = scmp.ge.s32.totalorder %s14, 6
      %s21 = sphi 0, %s33
      %s22 = sphi 0, %s29
      %s23 = sphi 0, %s21
      %s24 = sphi 0, %s22
      %s25 = sphi 0, %s23
      %s26 = sphi 0, %s24
      %s38 = sphi 0, %s40
      %s41 = sphi 0, %s38
      %s42 = sphi 0, %s41
      %s58 = sphi 0, %s42
      %s62 = sphi 0, %s62
      %s64 = sphi 0, %s62
      %s65 = sphi 0, %s64
      %s79 = sphi 0, %s65
      %s83 = sphi 0, %s83
      %s85 = sphi 0, %s83
      %s86 = sphi 0, %s85
      %s100 = sphi 0, %s86
      %s106 = sphi 0, %s108
      %s109 = sphi 0, %s106
      %s110 = sphi 0, %s109
      %s126 = sphi 0, %s110
    $region4: #{tpu_custom_call.1} parent=1 // loop_header_branch
      %17 = sbr.rel (%p15) target = $region8
    $region5: #{tpu_custom_call.1} parent=1 // loop_body
      %s19 = ssub.s32 %s14, 1
      %s20 = ssub.s32 %s14, 2
      %s27 = sadd.s32 1, %s22
      %p28 = scmp.ge.s32.totalorder %s27, 4
      %s29 = scalar_select %p28, 0, %s27
      %s30 = sadd.s32 1, %s21
      %s31 = scalar_select %p28, %s30, %s21
      %p32 = scmp.ge.s32.totalorder %s31, 1
      %s33 = scalar_select %p32, 0, %s31
      %s34 = ssub.s32 %s21, %s33
      %s35 = ssub.s32 %s22, %s29
      %s36 = sor.u32 %s34, %s35
      %p37 = scmp.eq.s32.totalorder %s36, 0
      %s39 = sadd.s32 %s38, 1
      %s40 = scalar_select %p37, %s38, %s39
      %p43 = pneg %p37
      %p44 = scmp.eq.s32.totalorder %s14, 3
      %p45 = por %p43, %p44
      %p46 = scmp.ne.s32.totalorder %s38, %s41
      %p47 = scmp.eq.s32.totalorder %s14, 0
      %p48 = por %p46, %p47
      %p49 = scmp.ne.s32.totalorder %s38, %s41
      %p50 = scmp.eq.s32.totalorder %s19, 3
      %p51 = por %p49, %p50
      %p52 = scmp.ne.s32.totalorder %s41, %s42
      %p53 = scmp.eq.s32.totalorder %s19, 0
      %p54 = por %p52, %p53
      %p55 = scmp.ne.s32.totalorder %s41, %s42
      %p56 = scmp.eq.s32.totalorder %s20, 3
      %p57 = por %p55, %p56
      %p59 = scmp.ne.s32.totalorder %s42, %s58
      %p60 = scmp.eq.s32.totalorder %s20, 0
      %p61 = por %p59, %p60
      %s63 = sadd.s32 %s62, 1
      %p66 = scmp.eq.s32.totalorder %s14, 3
      %p67 = scmp.ne.s32.totalorder %s62, %s64
      %p68 = scmp.eq.s32.totalorder %s14, 0
      %p69 = por %p67, %p68
      %p70 = scmp.ne.s32.totalorder %s62, %s64
      %p71 = scmp.eq.s32.totalorder %s19, 3
      %p72 = por %p70, %p71
      %p73 = scmp.ne.s32.totalorder %s64, %s65
      %p74 = scmp.eq.s32.totalorder %s19, 0
      %p75 = por %p73, %p74
      %p76 = scmp.ne.s32.totalorder %s64, %s65
      %p77 = scmp.eq.s32.totalorder %s20, 3
      %p78 = por %p76, %p77
      %p80 = scmp.ne.s32.totalorder %s65, %s79
      %p81 = scmp.eq.s32.totalorder %s20, 0
      %p82 = por %p80, %p81
      %s84 = sadd.s32 %s83, 1
      %p87 = scmp.eq.s32.totalorder %s14, 3
      %p88 = scmp.ne.s32.totalorder %s83, %s85
      %p89 = scmp.eq.s32.totalorder %s14, 0
      %p90 = por %p88, %p89
      %p91 = scmp.ne.s32.totalorder %s83, %s85
      %p92 = scmp.eq.s32.totalorder %s19, 3
      %p93 = por %p91, %p92
      %p94 = scmp.ne.s32.totalorder %s85, %s86
      %p95 = scmp.eq.s32.totalorder %s19, 0
      %p96 = por %p94, %p95
      %p97 = scmp.ne.s32.totalorder %s85, %s86
      %p98 = scmp.eq.s32.totalorder %s20, 3
      %p99 = por %p97, %p98
      %p101 = scmp.ne.s32.totalorder %s86, %s100
      %p102 = scmp.eq.s32.totalorder %s20, 0
      %p103 = por %p101, %p102
      %s104 = ssub.s32 %s21, %s33
      %p105 = scmp.eq.s32.totalorder %s104, 0
      %s107 = sadd.s32 %s106, 1
      %s108 = scalar_select %p105, %s106, %s107
      %p111 = pneg %p105
      %p112 = scmp.eq.s32.totalorder %s14, 3
      %p113 = por %p111, %p112
      %p114 = scmp.ne.s32.totalorder %s106, %s109
      %p115 = scmp.eq.s32.totalorder %s14, 0
      %p116 = por %p114, %p115
      %p117 = scmp.ne.s32.totalorder %s106, %s109
      %p118 = scmp.eq.s32.totalorder %s19, 3
      %p119 = por %p117, %p118
      %p120 = scmp.ne.s32.totalorder %s109, %s110
      %p121 = scmp.eq.s32.totalorder %s19, 0
      %p122 = por %p120, %p121
      %p123 = scmp.ne.s32.totalorder %s109, %s110
      %p124 = scmp.eq.s32.totalorder %s20, 3
      %p125 = por %p123, %p124
      %p127 = scmp.ne.s32.totalorder %s110, %s126
      %p128 = scmp.eq.s32.totalorder %s20, 0
      %p129 = por %p127, %p128
      %p130 = scmp.le.s32.totalorder 1, %s14
      %p131 = scmp.lt.s32.totalorder %s14, 5
      %p132 = pnand %p130, %p131
      %p133 = pneg %p132
      // Predicated region
      $region9: #{tpu_custom_call.1} parent=5 // pred_check
        _
      $region10: #{tpu_custom_call.1} parent=5 // pred_check_branch
        %135 = sbr.rel (%p132) target = $region12
      $region11: #{tpu_custom_call.1} parent=5 // pred_region
        %s136 = ssub.s32 %s14, 1
        // Predicated region
        $region13: #{tpu_custom_call.1} parent=11 // pred_check
          %p137 = pneg %p75
        $region14: #{tpu_custom_call.1} parent=11 // pred_check_branch
          %139 = sbr.rel (%p137) target = $region16
        $region15: #{tpu_custom_call.1} parent=11 // pred_region
          %s141 = ssub.s32 16384, 16384
          %142 = vsyncadd [#allocation6], %s141
          %s143 = sshll.u32 [#allocation5], 4
          %s144 = int_to_ptr.vmem [resolvable:$true] %s143
          %149 = dma.hbm_to_vmem [thread:$0]  %s1, 16384, %s144, [#allocation6], 128, 128, 8
        $region16: #{tpu_custom_call.1} parent=11 // pred_fallthru
          _
        // Predicated region
        $region17: #{tpu_custom_call.1} parent=11 // pred_check
          %p150 = pneg %p96
        $region18: #{tpu_custom_call.1} parent=11 // pred_check_branch
          %152 = sbr.rel (%p150) target = $region20
        $region19: #{tpu_custom_call.1} parent=11 // pred_region
          _
        $region20: #{tpu_custom_call.1} parent=11 // pred_fallthru
          _
      $region12: #{tpu_custom_call.1} parent=5 // pred_fallthru
        _
      %p153 = scmp.lt.s32.totalorder %s14, 4
      // Predicated region
      $region21: #{tpu_custom_call.1} parent=5 // pred_check
        %p154 = pneg %p153
      $region22: #{tpu_custom_call.1} parent=5 // pred_check_branch
        %156 = sbr.rel (%p154) target = $region24
      $region23: #{tpu_custom_call.1} parent=5 // pred_region
        // Predicated region
        $region25: #{tpu_custom_call.1} parent=23 // pred_check
          %p157 = pneg %p48
        $region26: #{tpu_custom_call.1} parent=23 // pred_check_branch
          %159 = sbr.rel (%p157) target = $region28
        $region27: #{tpu_custom_call.1} parent=23 // pred_region
          %s160 = sand.u32 %s38, 1
          %s161 = scalar_lea.sflag [#allocation3], %s160
          %s162 = sand.u32 %s38, 1
          %s163 = smul.addr %s162, 16
          %s164 = scalar_lea.vmem [#allocation2], %s163
          %s165 = smul.u32 2, %s22
          %s167 = ssub.s32 256, 256
          %168 = vsyncadd %s161, %s167
          %s169 = smul.addr %s21, 8
          %s170 = sadd.s32 %s165, %s169
          %s171 = smul.addr %s170, 128
          %s172 = scalar_lea.hbm %s0, %s171
          %s174 = sshll.u32 %s164, 4
          %s175 = int_to_ptr.vmem [resolvable:$true] %s174
          %177 = dma.hbm_to_vmem [thread:$0]  %s172, 256, %s175, %s161
        $region28: #{tpu_custom_call.1} parent=23 // pred_fallthru
          _
      $region24: #{tpu_custom_call.1} parent=5 // pred_fallthru
        _
      %p178 = scmp.le.s32.totalorder 1, %s14
      %p179 = scmp.lt.s32.totalorder %s14, 5
      %p180 = pnand %p178, %p179
      %p181 = pneg %p180
      // Predicated region
      $region29: #{tpu_custom_call.1} parent=5 // pred_check
        _
      $region30: #{tpu_custom_call.1} parent=5 // pred_check_branch
        %183 = sbr.rel (%p180) target = $region32
      $region31: #{tpu_custom_call.1} parent=5 // pred_region
        %s184 = ssub.s32 %s14, 1
        %s185 = sand.u32 %s41, 1
        %s186 = scalar_lea.sflag [#allocation3], %s185
        %s187 = sand.u32 %s41, 1
        %s188 = smul.addr %s187, 16
        %s189 = scalar_lea.vmem [#allocation2], %s188
        // Predicated region
        $region33: #{tpu_custom_call.1} parent=31 // pred_check
          %p190 = pneg %p54
        $region34: #{tpu_custom_call.1} parent=31 // pred_check_branch
          %192 = sbr.rel (%p190) target = $region36
        $region35: #{tpu_custom_call.1} parent=31 // pred_region
          %193 = dma.done %s186, 256
        $region36: #{tpu_custom_call.1} parent=31 // pred_fallthru
          _
        // Predicated region
        $region37: #{tpu_custom_call.1} parent=31 // pred_check
          %p194 = pneg %p75
        $region38: #{tpu_custom_call.1} parent=31 // pred_check_branch
          %196 = sbr.rel (%p194) target = $region40
        $region39: #{tpu_custom_call.1} parent=31 // pred_region
          %197 = dma.done [#allocation6], 16384
        $region40: #{tpu_custom_call.1} parent=31 // pred_fallthru
          _
        %s198 = sand.u32 %s41, 1
        %s199 = scalar_lea.sflag [#allocation3], %s198
        %s200 = sand.u32 %s41, 1
        %s201 = smul.addr %s200, 16
        %s202 = scalar_lea.vmem [#allocation2], %s201
        %p203 = pneg %p54
        %p204 = pneg %p51
        %p205 = pneg %p75
        %p206 = pneg %p72
        %p207 = pneg %p96
        %p208 = pneg %p93
        %p209 = pneg %p122
        %p210 = pneg %p119
        %s211 = smul.u32 2, %s24
        %p212 = scmp.eq.s32.totalorder %s24, 0
        // Predicated region
        $region41: #{tpu_custom_call.1} parent=31 // pred_check
          %p213 = pneg %p212
        $region42: #{tpu_custom_call.1} parent=31 // pred_check_branch
          %215 = sbr.rel (%p213) target = $region44
        $region43: #{tpu_custom_call.1} parent=31 // pred_region
          %v216 = vld [vmem:[%s2] sm:$0x1]
          %v218 = vlaneseq
          %v219 = vshrl.u32 %v218, 7
          %v220 = vsub.s32 0, %v219
          %v221 = vrot.slane %v216, %v220
          %223 = vst [vmem:[#allocation7] sm:$0xff] %v221
        $region44: #{tpu_custom_call.1} parent=31 // pred_fallthru
          _
        %v224 = vld [vmem:[%s189] sm:$0xff]
        %v225 = vld [vmem:[%s189 + $0x8] sm:$0xff]
        %s226 = smul.u32 %s24, 256
        %s227 = scalar_lea.vmem [#allocation5], %s226
        %v228 = vld [vmem:[%s227] sm:$0xff]
        %v229 = vld [vmem:[%s227 + $0x8] sm:$0xff]
        %v230 = vld [vmem:[%s227 + $0x10] sm:$0xff]
        %v231 = vld [vmem:[%s227 + $0x18] sm:$0xff]
        %v232 = vld [vmem:[%s227 + $0x20] sm:$0xff]
        %v233 = vld [vmem:[%s227 + $0x28] sm:$0xff]
        %v234 = vld [vmem:[%s227 + $0x30] sm:$0xff]
        %v235 = vld [vmem:[%s227 + $0x38] sm:$0xff]
        %v236 = vld [vmem:[%s227 + $0x40] sm:$0xff]
        %v237 = vld [vmem:[%s227 + $0x48] sm:$0xff]
        %v238 = vld [vmem:[%s227 + $0x50] sm:$0xff]
        %v239 = vld [vmem:[%s227 + $0x58] sm:$0xff]
        %v240 = vld [vmem:[%s227 + $0x60] sm:$0xff]
        %v241 = vld [vmem:[%s227 + $0x68] sm:$0xff]
        %v242 = vld [vmem:[%s227 + $0x70] sm:$0xff]
        %v243 = vld [vmem:[%s227 + $0x78] sm:$0xff]
        %v244 = vld [vmem:[%s227 + $0x80] sm:$0xff]
        %v245 = vld [vmem:[%s227 + $0x88] sm:$0xff]
        %v246 = vld [vmem:[%s227 + $0x90] sm:$0xff]
        %v247 = vld [vmem:[%s227 + $0x98] sm:$0xff]
        %v248 = vld [vmem:[%s227 + $0xa0] sm:$0xff]
        %v249 = vld [vmem:[%s227 + $0xa8] sm:$0xff]
        %v250 = vld [vmem:[%s227 + $0xb0] sm:$0xff]
        %v251 = vld [vmem:[%s227 + $0xb8] sm:$0xff]
        %v252 = vld [vmem:[%s227 + $0xc0] sm:$0xff]
        %v253 = vld [vmem:[%s227 + $0xc8] sm:$0xff]
        %v254 = vld [vmem:[%s227 + $0xd0] sm:$0xff]
        %v255 = vld [vmem:[%s227 + $0xd8] sm:$0xff]
        %v256 = vld [vmem:[%s227 + $0xe0] sm:$0xff]
        %v257 = vld [vmem:[%s227 + $0xe8] sm:$0xff]
        %v258 = vld [vmem:[%s227 + $0xf0] sm:$0xff]
        %v259 = vld [vmem:[%s227 + $0xf8] sm:$0xff]
        %v260 = vld [vmem:[#allocation7] sm:$0xff]
        %261 = vmatprep.subr.mxu0 0.0
        %262 = vmatpush1.msra.mxu0 %v228
        %263 = vmatprep.subr.mxu0 0.0
        %264 = vmatpush1.msra.mxu0 %v229
        %265 = vmatprep.subr.mxu0 0.0
        %266 = vmatpush1.msra.mxu0 %v230
        %267 = vmatprep.subr.mxu0 0.0
        %268 = vmatpush1.msra.mxu0 %v231
        %269 = vmatprep.subr.mxu0 0.0
        %270 = vmatpush1.msra.mxu0 %v232
        %271 = vmatprep.subr.mxu0 0.0
        %272 = vmatpush1.msra.mxu0 %v233
        %273 = vmatprep.subr.mxu0 0.0
        %274 = vmatpush1.msra.mxu0 %v234
        %275 = vmatprep.subr.mxu0 0.0
        %276 = vmatpush1.msra.mxu0 %v235
        %277 = vmatprep.subr.mxu0 0.0
        %278 = vmatpush1.msra.mxu0 %v236
        %279 = vmatprep.subr.mxu0 0.0
        %280 = vmatpush1.msra.mxu0 %v237
        %281 = vmatprep.subr.mxu0 0.0
        %282 = vmatpush1.msra.mxu0 %v238
        %283 = vmatprep.subr.mxu0 0.0
        %284 = vmatpush1.msra.mxu0 %v239
        %285 = vmatprep.subr.mxu0 0.0
        %286 = vmatpush1.msra.mxu0 %v240
        %287 = vmatprep.subr.mxu0 0.0
        %288 = vmatpush1.msra.mxu0 %v241
        %289 = vmatprep.subr.mxu0 0.0
        %290 = vmatpush1.msra.mxu0 %v242
        %291 = vmatprep.subr.mxu0 0.0
        %292 = vmatpush1.msra.mxu0 %v243
        %293 = vmatprep.subr.mxu0 0.0
        %294 = vmatpush1.msra.mxu0 %v244
        %295 = vmatprep.subr.mxu0 0.0
        %296 = vmatpush1.msra.mxu0 %v245
        %297 = vmatprep.subr.mxu0 0.0
        %298 = vmatpush1.msra.mxu0 %v246
        %299 = vmatprep.subr.mxu0 0.0
        %300 = vmatpush1.msra.mxu0 %v247
        %301 = vmatprep.subr.mxu0 0.0
        %302 = vmatpush1.msra.mxu0 %v248
        %303 = vmatprep.subr.mxu0 0.0
        %304 = vmatpush1.msra.mxu0 %v249
        %305 = vmatprep.subr.mxu0 0.0
        %306 = vmatpush1.msra.mxu0 %v250
        %307 = vmatprep.subr.mxu0 0.0
        %308 = vmatpush1.msra.mxu0 %v251
        %309 = vmatprep.subr.mxu0 0.0
        %310 = vmatpush1.msra.mxu0 %v252
        %311 = vmatprep.subr.mxu0 0.0
        %312 = vmatpush1.msra.mxu0 %v253
        %313 = vmatprep.subr.mxu0 0.0
        %314 = vmatpush1.msra.mxu0 %v254
        %315 = vmatprep.subr.mxu0 0.0
        %316 = vmatpush1.msra.mxu0 %v255
        %317 = vmatprep.subr.mxu0 0.0
        %318 = vmatpush1.msra.mxu0 %v256
        %319 = vmatprep.subr.mxu0 0.0
        %320 = vmatpush1.msra.mxu0 %v257
        %321 = vmatprep.subr.mxu0 0.0
        %322 = vmatpush1.msra.mxu0 %v258
        %323 = vmatprep.subr.mxu0 0.0
        %324 = vmatpush1.msra.mxu0 %v259
        %325 = vmatprep.mubr.f32.mxu0 %v225
        %326 = vmatmul.mubr.f32.gmra.mrb[0].mxu0 %v224
        %v327 = vpop.f32.mrb[0].mxu0
        %v328 = vadd.f32 0.0, %v327
        %v329 = vpop.f32.mrb[0].mxu0
        %330 = vdwg.mxu0
        %v331 = vadd.f32 %v260, %v328
        %332 = vst [vmem:[#allocation7] sm:$0xff] %v331
        // Predicated region
        $region45: #{tpu_custom_call.1} parent=31 // pred_check
          %p333 = pneg %p119
        $region46: #{tpu_custom_call.1} parent=31 // pred_check_branch
          %335 = sbr.rel (%p333) target = $region48
        $region47: #{tpu_custom_call.1} parent=31 // pred_region
          %s337 = ssub.s32 128, 128
          %338 = vsyncadd [#allocation4], %s337
          %s339 = smul.addr %s23, 128
          %s340 = scalar_lea.hbm %s3, %s339
          %s342 = sshll.u32 [#allocation7], 4
          %s343 = int_to_ptr.vmem [resolvable:$true] %s342
          %345 = dma.vmem_to_hbm [thread:$0]  %s343, 128, %s340, [#allocation4]
        $region48: #{tpu_custom_call.1} parent=31 // pred_fallthru
          _
        // Predicated region
        $region49: #{tpu_custom_call.1} parent=31 // pred_check
          %p346 = pneg %p119
        $region50: #{tpu_custom_call.1} parent=31 // pred_check_branch
          %348 = sbr.rel (%p346) target = $region52
        $region51: #{tpu_custom_call.1} parent=31 // pred_region
          %349 = dma.done [#allocation4], 128
        $region52: #{tpu_custom_call.1} parent=31 // pred_fallthru
          _
      $region32: #{tpu_custom_call.1} parent=5 // pred_fallthru
        _
      %p350 = scmp.le.s32.totalorder 2, %s14
      // Predicated region
      $region53: #{tpu_custom_call.1} parent=5 // pred_check
        %p351 = pneg %p350
      $region54: #{tpu_custom_call.1} parent=5 // pred_check_branch
        %353 = sbr.rel (%p351) target = $region56
      $region55: #{tpu_custom_call.1} parent=5 // pred_region
        %s354 = ssub.s32 %s14, 2
      $region56: #{tpu_custom_call.1} parent=5 // pred_fallthru
        _
    $region6: #{tpu_custom_call.1} parent=1 // loop_footer
      %s18 = sadd.s32 1, %s14
    $region7: #{tpu_custom_call.1} parent=1 // loop_footer_branch
      %13 = sbr.rel target = $region3
    $region8: #{tpu_custom_call.1} parent=1 // loop_exit
      _
    %355 = vsyncpa [#allocation3], 1
    %s356 = scalar_lea.sflag [#allocation3], 1
    %357 = vsyncpa %s356, 1
    %358 = vsyncpa [#allocation6], 1
    %359 = vsyncpa [#allocation4], 1
    %s360 = scalar_lea.sflag [#allocation4], 1
    %361 = vsyncpa %s360, 1

</llo_original>
